<compile_context>
chip_gen: v7x
topology: tpu7x:2x2x1
jax: 0.10.0
libtpu: 0.0.40
codegen_flags: <defaults>
</compile_context>

<pallas_src>
import functools

import jax
import jax.numpy as jnp
from jax.experimental import pallas as pl
from jax.experimental.pallas import tpu as pltpu

# Hidden layer widths of GrowthNN (nn.Sequential of Linear/ReLU pairs).
LAYER_SIZES = [64, 128, 256, 128, 64, 32, 1]


def growth_nn_kernel(x_ref,
                     w1, b1, w2, b2, w3, b3, w4, b4, w5, b5, w6, b6,
                     w7, b7, o_ref):
    """One batch tile of the MLP, fully VMEM-resident.

    x_ref : (TILE_B, input_size)  compute dtype (f32 or bf16)
    w1..w6: (in, out) compute dtype,  b1..b6: (1, out) compute dtype
    w7    : (1, 32) f32,  b7: (1, 1) f32   (final layer done on VPU/XLU)
    o_ref : (1, TILE_B) f32  lane-dense output (batch on the lane axis)
    """
    cdt = x_ref.dtype
    h = x_ref[...]
    # Hidden layers: MXU matmul with f32 accumulation.  Bias add + ReLU run in
    # the compute dtype: bf16 on v6e/v7x (bf16-capable VALU, no extra cast),
    # f32 otherwise (v5e has no bf16 VPU path).
    for w_ref, b_ref in ((w1, b1), (w2, b2), (w3, b3),
                         (w4, b4), (w5, b5), (w6, b6)):
        y = jnp.dot(h, w_ref[...], preferred_element_type=jnp.float32)
        h = jnp.maximum(y.astype(cdt) + b_ref[...], 0)
    # Final 32 -> 1 layer: an N=1, K=32 matmul wastes an MXU pass; do it as a
    # VPU multiply + lane reduction (XLU), then write transposed so the store
    # is a full-lane-width vst instead of a masked lane-width-1 store.
    h32 = h.astype(jnp.float32)
    col = jnp.sum(h32 * w7[...], axis=-1, keepdims=True) + b7[...]   # (TILE_B, 1)
    o_ref[...] = col.T.astype(o_ref.dtype)                           # (1, TILE_B)


def init_params(key, input_size):
    """PyTorch nn.Linear default init (uniform(-1/sqrt(fan_in), 1/sqrt(fan_in))).
    Weights stored transposed as (in, out); biases as (1, out)."""
    params = []
    fan_in = input_size
    for fan_out in LAYER_SIZES:
        key, kw, kb = jax.random.split(key, 3)
        bound = 1.0 / jnp.sqrt(jnp.asarray(fan_in, jnp.float32))
        w = jax.random.uniform(kw, (fan_in, fan_out), jnp.float32,
                               minval=-bound, maxval=bound)
        b = jax.random.uniform(kb, (1, fan_out), jnp.float32,
                               minval=-bound, maxval=bound)
        params.append((w, b))
        fan_in = fan_out
    return params


def _round_up(n, m):
    return -(-n // m) * m


@functools.partial(jax.jit, static_argnames=("tile_b", "compute_dtype"))
def growth_nn_forward(x, params, *, tile_b=1024, compute_dtype=jnp.float32):
    batch, input_size = x.shape

    # (8,128) tiling constraint for f32, (16,128) for bf16 on the x / out
    # BlockSpecs: round the requested tile, and don't tile wider than the
    # (rounded-up) batch so small batches stay a single small tile.
    sublane = 8 * 4 // jnp.dtype(compute_dtype).itemsize          # 8 f32 / 16 bf16
    tile = max(sublane,
               min(_round_up(tile_b, sublane), _round_up(batch, sublane)))
    num_tiles = -(-batch // tile)                                  # ceil-div
    padded = num_tiles * tile

    # Pad the batch to a whole number of tiles (sliced off after the call).
    x_pad = jnp.pad(x, ((0, padded - batch), (0, 0))).astype(compute_dtype)

    flat = []
    for i, (w, b) in enumerate(params):
        if i < len(params) - 1:
            # Hidden layers: weights AND biases in the compute dtype so the
            # bias-add/ReLU epilogue runs natively (bf16 on v6e/v7x).
            flat.extend([w.astype(compute_dtype), b.astype(compute_dtype)])
        else:
            # Final (32, 1) weight passed as a (1, 32) f32 row for the VPU path.
            flat.extend([w.T.astype(jnp.float32), b.astype(jnp.float32)])

    x_spec = pl.BlockSpec((tile, input_size), lambda i: (i, 0))
    # Constant index_map -> weights fetched once, kept VMEM-resident.
    param_specs = [pl.BlockSpec(p.shape, lambda i: (0, 0)) for p in flat]
    # Lane-dense output: batch on the lane axis, one (1, TILE_B) block per step.
    out_spec = pl.BlockSpec((1, tile), lambda i: (0, i))

    sizes = [input_size] + LAYER_SIZES
    flops = 2 * padded * sum(a * b for a, b in zip(sizes[:-1], sizes[1:]))
    bytes_accessed = (x_pad.size * x_pad.dtype.itemsize
                      + padded * 4
                      + sum(p.size * p.dtype.itemsize for p in flat))

    out = pl.pallas_call(
        growth_nn_kernel,
        out_shape=jax.ShapeDtypeStruct((1, padded), jnp.float32),
        grid_spec=pltpu.PrefetchScalarGridSpec(
            num_scalar_prefetch=0,
            grid=(num_tiles,),
            in_specs=[x_spec] + param_specs,
            out_specs=out_spec,
        ),
        compiler_params=pltpu.CompilerParams(
            # Batch tiles are independent -> shard over v7x's 2 TensorCores.
            dimension_semantics=("parallel",),
            # Plenty on every generation: even tile 2048 f32 keeps live
            # activations + double-buffered x + weights under ~6 MiB.
            vmem_limit_bytes=32 * 1024 * 1024,
        ),
        cost_estimate=pl.CostEstimate(
            flops=flops, transcendentals=0, bytes_accessed=bytes_accessed),
    )(x_pad, *flat)

    return out.reshape(-1)[:batch, None]


def reference_forward(x, params):
    """Plain-JAX reference (mirrors the PyTorch module)."""
    h = x
    for i, (w, b) in enumerate(params):
        h = h @ w + b
        if i < len(params) - 1:
            h = jnp.maximum(h, 0.0)
    return h


if __name__ == "__main__":
    key = jax.random.PRNGKey(0)
    k_x, k_p, k_x2 = jax.random.split(key, 3)

    batch, input_size = 8, 16
    x = jax.random.normal(k_x, (batch, input_size), jnp.float32)
    params = init_params(k_p, input_size)
    ref = reference_forward(x, params)

    # f32 compute path (tile auto-capped to the tiny batch).
    # Tolerance note: both kernel and reference use TPU default matmul
    # precision (bf16 MXU feeds), but the kernel's final 32->1 layer is exact
    # f32 on the VPU while the reference's is MXU-truncated, so allow ~5e-3.
    out = jax.block_until_ready(growth_nn_forward(x, params))
    assert out.shape == (batch, 1), out.shape
    assert jnp.allclose(out, ref, atol=5e-3, rtol=5e-3), (
        f"f32 max abs err = {jnp.max(jnp.abs(out - ref))}")

    # Multi-tile grid with tail padding: batch=300 -> 3 tiles of 128.
    x2 = jax.random.normal(k_x2, (300, input_size), jnp.float32)
    ref2 = reference_forward(x2, params)
    out2 = jax.block_until_ready(growth_nn_forward(x2, params, tile_b=128))
    assert out2.shape == (300, 1), out2.shape
    assert jnp.allclose(out2, ref2, atol=5e-3, rtol=5e-3), (
        f"multi-tile max abs err = {jnp.max(jnp.abs(out2 - ref2))}")

    # bf16 MXU feed + bf16 VPU epilogue (v6e/v7x fast path); loose tolerance.
    out_bf16 = jax.block_until_ready(
        growth_nn_forward(x, params, compute_dtype=jnp.bfloat16))
    assert out_bf16.shape == (batch, 1), out_bf16.shape
    assert jnp.allclose(out_bf16, ref, atol=1e-1, rtol=1e-1), (
        f"bf16 max abs err = {jnp.max(jnp.abs(out_bf16 - ref))}")

    print("KERNEL_OK")
</pallas_src>

<mosaic_0001>
module attributes {stable_mosaic.version = 11 : i64} {
  func.func @growth_nn_kernel(%arg0: i32, %arg1: memref<8x16xf32, #tpu.memory_space<vmem>>, %arg2: memref<16x64xf32, #tpu.memory_space<vmem>>, %arg3: memref<1x64xf32, #tpu.memory_space<vmem>>, %arg4: memref<64x128xf32, #tpu.memory_space<vmem>>, %arg5: memref<1x128xf32, #tpu.memory_space<vmem>>, %arg6: memref<128x256xf32, #tpu.memory_space<vmem>>, %arg7: memref<1x256xf32, #tpu.memory_space<vmem>>, %arg8: memref<256x128xf32, #tpu.memory_space<vmem>>, %arg9: memref<1x128xf32, #tpu.memory_space<vmem>>, %arg10: memref<128x64xf32, #tpu.memory_space<vmem>>, %arg11: memref<1x64xf32, #tpu.memory_space<vmem>>, %arg12: memref<64x32xf32, #tpu.memory_space<vmem>>, %arg13: memref<1x32xf32, #tpu.memory_space<vmem>>, %arg14: memref<1x32xf32, #tpu.memory_space<vmem>>, %arg15: memref<1x1xf32, #tpu.memory_space<vmem>>, %arg16: memref<1x8xf32, #tpu.memory_space<vmem>>) attributes {dimension_semantics = [#tpu.dimension_semantics<parallel>], iteration_bounds = array<i64: 1>, scalar_prefetch = 0 : i64, scratch_operands = 0 : i64, tpu.core_type = #tpu.core_type<tc>, window_params = [{transform_indices = @transform_0, window_bounds = array<i64: 8, 16>}, {pipeline_mode = #tpu.pipeline_mode<synchronous>, transform_indices = @transform_1, window_bounds = array<i64: 16, 64>}, {pipeline_mode = #tpu.pipeline_mode<synchronous>, transform_indices = @transform_2, window_bounds = array<i64: 1, 64>}, {pipeline_mode = #tpu.pipeline_mode<synchronous>, transform_indices = @transform_3, window_bounds = array<i64: 64, 128>}, {pipeline_mode = #tpu.pipeline_mode<synchronous>, transform_indices = @transform_4, window_bounds = array<i64: 1, 128>}, {pipeline_mode = #tpu.pipeline_mode<synchronous>, transform_indices = @transform_5, window_bounds = array<i64: 128, 256>}, {pipeline_mode = #tpu.pipeline_mode<synchronous>, transform_indices = @transform_6, window_bounds = array<i64: 1, 256>}, {pipeline_mode = #tpu.pipeline_mode<synchronous>, transform_indices = @transform_7, window_bounds = array<i64: 256, 128>}, {pipeline_mode = #tpu.pipeline_mode<synchronous>, transform_indices = @transform_8, window_bounds = array<i64: 1, 128>}, {pipeline_mode = #tpu.pipeline_mode<synchronous>, transform_indices = @transform_9, window_bounds = array<i64: 128, 64>}, {pipeline_mode = #tpu.pipeline_mode<synchronous>, transform_indices = @transform_10, window_bounds = array<i64: 1, 64>}, {pipeline_mode = #tpu.pipeline_mode<synchronous>, transform_indices = @transform_11, window_bounds = array<i64: 64, 32>}, {pipeline_mode = #tpu.pipeline_mode<synchronous>, transform_indices = @transform_12, window_bounds = array<i64: 1, 32>}, {pipeline_mode = #tpu.pipeline_mode<synchronous>, transform_indices = @transform_13, window_bounds = array<i64: 1, 32>}, {pipeline_mode = #tpu.pipeline_mode<synchronous>, transform_indices = @transform_14, window_bounds = array<i64: 1, 1>}, {transform_indices = @transform_15, window_bounds = array<i64: 1, 8>}]} {
    %c0 = arith.constant 0 : index
    %c0_0 = arith.constant 0 : index
    %0 = vector.load %arg1[%c0, %c0_0] : memref<8x16xf32, #tpu.memory_space<vmem>>, vector<8x16xf32>
    %c0_1 = arith.constant 0 : index
    %c0_2 = arith.constant 0 : index
    %1 = vector.load %arg2[%c0_1, %c0_2] : memref<16x64xf32, #tpu.memory_space<vmem>>, vector<16x64xf32>
    %cst = arith.constant dense<0.000000e+00> : vector<8x64xf32>
    %2 = tpu.matmul %0, %1, %cst {dimension_numbers = #tpu.dot_dimension_numbers<[1], [0], [0], [1], [0, 0, 1, 1], [], []>} : vector<8x16xf32>, vector<16x64xf32>, vector<8x64xf32> -> vector<8x64xf32>
    %c0_3 = arith.constant 0 : index
    %c0_4 = arith.constant 0 : index
    %3 = vector.load %arg3[%c0_3, %c0_4] : memref<1x64xf32, #tpu.memory_space<vmem>>, vector<1x64xf32>
    %4 = vector.broadcast %3 : vector<1x64xf32> to vector<8x64xf32>
    %5 = arith.addf %2, %4 : vector<8x64xf32>
    %cst_5 = arith.constant 0.000000e+00 : f32
    %6 = vector.broadcast %cst_5 : f32 to vector<8x64xf32>
    %7 = arith.maximumf %5, %6 : vector<8x64xf32>
    %c0_6 = arith.constant 0 : index
    %c0_7 = arith.constant 0 : index
    %8 = vector.load %arg4[%c0_6, %c0_7] : memref<64x128xf32, #tpu.memory_space<vmem>>, vector<64x128xf32>
    %cst_8 = arith.constant dense<0.000000e+00> : vector<8x128xf32>
    %9 = tpu.matmul %7, %8, %cst_8 {dimension_numbers = #tpu.dot_dimension_numbers<[1], [0], [0], [1], [0, 0, 1, 1], [], []>} : vector<8x64xf32>, vector<64x128xf32>, vector<8x128xf32> -> vector<8x128xf32>
    %c0_9 = arith.constant 0 : index
    %c0_10 = arith.constant 0 : index
    %10 = vector.load %arg5[%c0_9, %c0_10] : memref<1x128xf32, #tpu.memory_space<vmem>>, vector<1x128xf32>
    %11 = vector.broadcast %10 : vector<1x128xf32> to vector<8x128xf32>
    %12 = arith.addf %9, %11 : vector<8x128xf32>
    %cst_11 = arith.constant 0.000000e+00 : f32
    %13 = vector.broadcast %cst_11 : f32 to vector<8x128xf32>
    %14 = arith.maximumf %12, %13 : vector<8x128xf32>
    %c0_12 = arith.constant 0 : index
    %c0_13 = arith.constant 0 : index
    %15 = vector.load %arg6[%c0_12, %c0_13] : memref<128x256xf32, #tpu.memory_space<vmem>>, vector<128x256xf32>
    %cst_14 = arith.constant dense<0.000000e+00> : vector<8x256xf32>
    %16 = tpu.matmul %14, %15, %cst_14 {dimension_numbers = #tpu.dot_dimension_numbers<[1], [0], [0], [1], [0, 0, 1, 1], [], []>} : vector<8x128xf32>, vector<128x256xf32>, vector<8x256xf32> -> vector<8x256xf32>
    %c0_15 = arith.constant 0 : index
    %c0_16 = arith.constant 0 : index
    %17 = vector.load %arg7[%c0_15, %c0_16] : memref<1x256xf32, #tpu.memory_space<vmem>>, vector<1x256xf32>
    %18 = vector.broadcast %17 : vector<1x256xf32> to vector<8x256xf32>
    %19 = arith.addf %16, %18 : vector<8x256xf32>
    %cst_17 = arith.constant 0.000000e+00 : f32
    %20 = vector.broadcast %cst_17 : f32 to vector<8x256xf32>
    %21 = arith.maximumf %19, %20 : vector<8x256xf32>
    %c0_18 = arith.constant 0 : index
    %c0_19 = arith.constant 0 : index
    %22 = vector.load %arg8[%c0_18, %c0_19] : memref<256x128xf32, #tpu.memory_space<vmem>>, vector<256x128xf32>
    %cst_20 = arith.constant dense<0.000000e+00> : vector<8x128xf32>
    %23 = tpu.matmul %21, %22, %cst_20 {dimension_numbers = #tpu.dot_dimension_numbers<[1], [0], [0], [1], [0, 0, 1, 1], [], []>} : vector<8x256xf32>, vector<256x128xf32>, vector<8x128xf32> -> vector<8x128xf32>
    %c0_21 = arith.constant 0 : index
    %c0_22 = arith.constant 0 : index
    %24 = vector.load %arg9[%c0_21, %c0_22] : memref<1x128xf32, #tpu.memory_space<vmem>>, vector<1x128xf32>
    %25 = vector.broadcast %24 : vector<1x128xf32> to vector<8x128xf32>
    %26 = arith.addf %23, %25 : vector<8x128xf32>
    %cst_23 = arith.constant 0.000000e+00 : f32
    %27 = vector.broadcast %cst_23 : f32 to vector<8x128xf32>
    %28 = arith.maximumf %26, %27 : vector<8x128xf32>
    %c0_24 = arith.constant 0 : index
    %c0_25 = arith.constant 0 : index
    %29 = vector.load %arg10[%c0_24, %c0_25] : memref<128x64xf32, #tpu.memory_space<vmem>>, vector<128x64xf32>
    %cst_26 = arith.constant dense<0.000000e+00> : vector<8x64xf32>
    %30 = tpu.matmul %28, %29, %cst_26 {dimension_numbers = #tpu.dot_dimension_numbers<[1], [0], [0], [1], [0, 0, 1, 1], [], []>} : vector<8x128xf32>, vector<128x64xf32>, vector<8x64xf32> -> vector<8x64xf32>
    %c0_27 = arith.constant 0 : index
    %c0_28 = arith.constant 0 : index
    %31 = vector.load %arg11[%c0_27, %c0_28] : memref<1x64xf32, #tpu.memory_space<vmem>>, vector<1x64xf32>
    %32 = vector.broadcast %31 : vector<1x64xf32> to vector<8x64xf32>
    %33 = arith.addf %30, %32 : vector<8x64xf32>
    %cst_29 = arith.constant 0.000000e+00 : f32
    %34 = vector.broadcast %cst_29 : f32 to vector<8x64xf32>
    %35 = arith.maximumf %33, %34 : vector<8x64xf32>
    %c0_30 = arith.constant 0 : index
    %c0_31 = arith.constant 0 : index
    %36 = vector.load %arg12[%c0_30, %c0_31] : memref<64x32xf32, #tpu.memory_space<vmem>>, vector<64x32xf32>
    %cst_32 = arith.constant dense<0.000000e+00> : vector<8x32xf32>
    %37 = tpu.matmul %35, %36, %cst_32 {dimension_numbers = #tpu.dot_dimension_numbers<[1], [0], [0], [1], [0, 0, 1, 1], [], []>} : vector<8x64xf32>, vector<64x32xf32>, vector<8x32xf32> -> vector<8x32xf32>
    %c0_33 = arith.constant 0 : index
    %c0_34 = arith.constant 0 : index
    %38 = vector.load %arg13[%c0_33, %c0_34] : memref<1x32xf32, #tpu.memory_space<vmem>>, vector<1x32xf32>
    %39 = vector.broadcast %38 : vector<1x32xf32> to vector<8x32xf32>
    %40 = arith.addf %37, %39 : vector<8x32xf32>
    %cst_35 = arith.constant 0.000000e+00 : f32
    %41 = vector.broadcast %cst_35 : f32 to vector<8x32xf32>
    %42 = arith.maximumf %40, %41 : vector<8x32xf32>
    %c0_36 = arith.constant 0 : index
    %c0_37 = arith.constant 0 : index
    %43 = vector.load %arg14[%c0_36, %c0_37] : memref<1x32xf32, #tpu.memory_space<vmem>>, vector<1x32xf32>
    %44 = vector.broadcast %43 : vector<1x32xf32> to vector<8x32xf32>
    %45 = arith.mulf %42, %44 : vector<8x32xf32>
    %cst_38 = arith.constant dense<0.000000e+00> : vector<8xf32>
    %46 = vector.multi_reduction <add>, %45, %cst_38 [1] : vector<8x32xf32> to vector<8xf32>
    %47 = vector.shape_cast %46 : vector<8xf32> to vector<8x1xf32>
    %c0_39 = arith.constant 0 : index
    %c0_40 = arith.constant 0 : index
    %48 = vector.load %arg15[%c0_39, %c0_40] : memref<1x1xf32, #tpu.memory_space<vmem>>, vector<1x1xf32>
    %49 = vector.broadcast %48 : vector<1x1xf32> to vector<8x1xf32>
    %50 = arith.addf %47, %49 : vector<8x1xf32>
    %51 = tpu.transpose %50, [1, 0] : vector<8x1xf32> -> vector<1x8xf32>
    %c0_41 = arith.constant 0 : index
    %c0_42 = arith.constant 0 : index
    %52 = vector.load %arg16[%c0_41, %c0_42] : memref<1x8xf32, #tpu.memory_space<vmem>>, vector<1x8xf32>
    tpu.vector_store %arg16[%c0_41, %c0_42], %51 {strides = array<i32>} : memref<1x8xf32, #tpu.memory_space<vmem>>, vector<1x8xf32>,
    return
  }
  func.func @transform_0(%arg0: i32) -> (i32, i32) {
    %c0_i32 = arith.constant 0 : i32
    %c0_i32_0 = arith.constant 0 : i32
    return %arg0, %c0_i32 : i32, i32
  }
  func.func @transform_1(%arg0: i32) -> (i32, i32) {
    %c0_i32 = arith.constant 0 : i32
    %c0_i32_0 = arith.constant 0 : i32
    %c0_i32_1 = arith.constant 0 : i32
    return %c0_i32, %c0_i32_0 : i32, i32
  }
  func.func @transform_2(%arg0: i32) -> (i32, i32) {
    %c0_i32 = arith.constant 0 : i32
    %c0_i32_0 = arith.constant 0 : i32
    %c0_i32_1 = arith.constant 0 : i32
    return %c0_i32, %c0_i32_0 : i32, i32
  }
  func.func @transform_3(%arg0: i32) -> (i32, i32) {
    %c0_i32 = arith.constant 0 : i32
    %c0_i32_0 = arith.constant 0 : i32
    %c0_i32_1 = arith.constant 0 : i32
    return %c0_i32, %c0_i32_0 : i32, i32
  }
  func.func @transform_4(%arg0: i32) -> (i32, i32) {
    %c0_i32 = arith.constant 0 : i32
    %c0_i32_0 = arith.constant 0 : i32
    %c0_i32_1 = arith.constant 0 : i32
    return %c0_i32, %c0_i32_0 : i32, i32
  }
  func.func @transform_5(%arg0: i32) -> (i32, i32) {
    %c0_i32 = arith.constant 0 : i32
    %c0_i32_0 = arith.constant 0 : i32
    %c0_i32_1 = arith.constant 0 : i32
    return %c0_i32, %c0_i32_0 : i32, i32
  }
  func.func @transform_6(%arg0: i32) -> (i32, i32) {
    %c0_i32 = arith.constant 0 : i32
    %c0_i32_0 = arith.constant 0 : i32
    %c0_i32_1 = arith.constant 0 : i32
    return %c0_i32, %c0_i32_0 : i32, i32
  }
  func.func @transform_7(%arg0: i32) -> (i32, i32) {
    %c0_i32 = arith.constant 0 : i32
    %c0_i32_0 = arith.constant 0 : i32
    %c0_i32_1 = arith.constant 0 : i32
    return %c0_i32, %c0_i32_0 : i32, i32
  }
  func.func @transform_8(%arg0: i32) -> (i32, i32) {
    %c0_i32 = arith.constant 0 : i32
    %c0_i32_0 = arith.constant 0 : i32
    %c0_i32_1 = arith.constant 0 : i32
    return %c0_i32, %c0_i32_0 : i32, i32
  }
  func.func @transform_9(%arg0: i32) -> (i32, i32) {
    %c0_i32 = arith.constant 0 : i32
    %c0_i32_0 = arith.constant 0 : i32
    %c0_i32_1 = arith.constant 0 : i32
    return %c0_i32, %c0_i32_0 : i32, i32
  }
  func.func @transform_10(%arg0: i32) -> (i32, i32) {
    %c0_i32 = arith.constant 0 : i32
    %c0_i32_0 = arith.constant 0 : i32
    %c0_i32_1 = arith.constant 0 : i32
    return %c0_i32, %c0_i32_0 : i32, i32
  }
  func.func @transform_11(%arg0: i32) -> (i32, i32) {
    %c0_i32 = arith.constant 0 : i32
    %c0_i32_0 = arith.constant 0 : i32
    %c0_i32_1 = arith.constant 0 : i32
    return %c0_i32, %c0_i32_0 : i32, i32
  }
  func.func @transform_12(%arg0: i32) -> (i32, i32) {
    %c0_i32 = arith.constant 0 : i32
    %c0_i32_0 = arith.constant 0 : i32
    %c0_i32_1 = arith.constant 0 : i32
    return %c0_i32, %c0_i32_0 : i32, i32
  }
  func.func @transform_13(%arg0: i32) -> (i32, i32) {
    %c0_i32 = arith.constant 0 : i32
    %c0_i32_0 = arith.constant 0 : i32
    %c0_i32_1 = arith.constant 0 : i32
    return %c0_i32, %c0_i32_0 : i32, i32
  }
  func.func @transform_14(%arg0: i32) -> (i32, i32) {
    %c0_i32 = arith.constant 0 : i32
    %c0_i32_0 = arith.constant 0 : i32
    %c0_i32_1 = arith.constant 0 : i32
    return %c0_i32, %c0_i32_0 : i32, i32
  }
  func.func @transform_15(%arg0: i32) -> (i32, i32) {
    %c0_i32 = arith.constant 0 : i32
    %c0_i32_0 = arith.constant 0 : i32
    return %c0_i32, %arg0 : i32, i32
  }
}

</mosaic_0001>

<llo_original>
// kernel: growth_nn_forward.1
$region0: #{growth_nn_forward.1}
  #allocation0 [shape = 'u32[]', space=smem, size = 0x4, offset = 0x4, fixed_abs, tag = 'smem constant byte address 0x4 - core index']
  #allocation1 [shape = 'u32[144,128]{1,0:T(1,128)}', space=vmem, size = 0x12000, scoped, tag = 'internal scratch']
  #allocation2 [shape = 'f32[1,1]{1,0:T(1,128)S(1)}', space=vmem, size = 0x200, scoped, tag = 'scoped memory for growth_nn_forward.1']
  %s0 = inlined_call_operand.hbm [shape: f32[8,16], index: 0, kind: input, shape index: {}]
  %s1 = inlined_call_operand.hbm [shape: f32[16,64], index: 1, kind: input, shape index: {}]
  %s2 = inlined_call_operand.hbm [shape: f32[1,64], index: 2, kind: input, shape index: {}]
  %s3 = inlined_call_operand.hbm [shape: f32[64,128], index: 3, kind: input, shape index: {}]
  %s4 = inlined_call_operand.hbm [shape: f32[1,128], index: 4, kind: input, shape index: {}]
  %s5 = inlined_call_operand.vmem [shape: f32[128,256], index: 5, kind: input, shape index: {}]
  %s6 = inlined_call_operand.vmem [shape: f32[1,256], index: 6, kind: input, shape index: {}]
  %s7 = inlined_call_operand.hbm [shape: f32[256,128], index: 7, kind: input, shape index: {}]
  %s8 = inlined_call_operand.vmem [shape: f32[1,128], index: 8, kind: input, shape index: {}]
  %s9 = inlined_call_operand.vmem [shape: f32[128,64], index: 9, kind: input, shape index: {}]
  %s10 = inlined_call_operand.vmem [shape: f32[1,64], index: 10, kind: input, shape index: {}]
  %s11 = inlined_call_operand.vmem [shape: f32[64,32], index: 11, kind: input, shape index: {}]
  %s12 = inlined_call_operand.vmem [shape: f32[1,32], index: 12, kind: input, shape index: {}]
  %s13 = inlined_call_operand.vmem [shape: f32[1,32], index: 13, kind: input, shape index: {}]
  %s14 = inlined_call_operand.<no memory space> [shape: f32[1,1], index: 14, kind: input, shape index: {}]
  %s15 = inlined_call_operand.hbm [shape: f32[1,8], index: 15, kind: output, shape index: {}]
  %s16 = sld [smem:[#allocation0]]
  $region94: #{growth_nn_forward.1} parent=0
    _
  %s18 = ssub.s32 1, %s16
  %s19 = scalar_select 0, %s18, %s16
  %v20 = vstv %s14
  %21 = vst [vmem:[#allocation2] sm:$0x1] %v20
  $region1: #{growth_nn_forward.1} parent=0
    #allocation3 [shape = 'u8[4096]{0}', space=vmem, size = 0x1000, scoped, tag = 'input window, operand 0, single buffered']
    #allocation4 [shape = 's32[1]{0}', space=sflag, size = 0x4, scoped, tag = 'scoped memory for growth_nn_forward.1']
    #allocation5 [shape = 's32[1]{0}', space=sflag, size = 0x4, scoped, tag = 'scoped memory for growth_nn_forward.1']
    #allocation6 [shape = 'u8[8192]{0}', space=vmem, size = 0x2000, scoped, tag = 'input window, operand 1, single buffered']
    #allocation7 [shape = 's32[1]{0}', space=sflag, size = 0x4, scoped, tag = 'scoped memory for growth_nn_forward.1']
    #allocation8 [shape = 'u8[512]{0}', space=vmem, size = 0x400, scoped, tag = 'input window, operand 2, single buffered']
    #allocation9 [shape = 'u8[32768]{0}', space=vmem, size = 0x8000, scoped, tag = 'input window, operand 3, single buffered']
    #allocation10 [shape = 's32[1]{0}', space=sflag, size = 0x4, scoped, tag = 'scoped memory for growth_nn_forward.1']
    #allocation11 [shape = 'u8[512]{0}', space=vmem, size = 0x400, scoped, tag = 'input window, operand 4, single buffered']
    #allocation12 [shape = 'u8[131072]{0}', space=vmem, size = 0x20000, scoped, tag = 'input window, operand 7, single buffered']
    #allocation13 [shape = 's32[1]{0}', space=sflag, size = 0x4, scoped, tag = 'scoped memory for growth_nn_forward.1']
    #allocation14 [shape = 'u8[512]{0}', space=vmem, size = 0x400, scoped, tag = 'output window, operand 0, single buffered']
    %22 = vsyncpa [#allocation4], 0
    %23 = vsyncpa [#allocation7], 0
    %24 = vsyncpa [#allocation10], 0
    %25 = vsyncpa [#allocation13], 0
    %26 = vsyncpa [#allocation5], 0
    // Predicated region
    $region2: #{growth_nn_forward.1} parent=1 // pred_check
      _
    $region3: #{growth_nn_forward.1} parent=1 // pred_check_branch
      %28 = sbr.rel (0) target = $region5
    $region4: #{growth_nn_forward.1} parent=1 // pred_region
      %s30 = ssub.s32 128, 128
      %31 = vsyncadd [#allocation4], %s30
      %s33 = sshll.u32 [#allocation3], 4
      %s34 = int_to_ptr.vmem [resolvable:$true] %s33
      %36 = dma.hbm_to_vmem [thread:$0]  %s0, 128, %s34, [#allocation4]
    $region5: #{growth_nn_forward.1} parent=1 // pred_fallthru
      _
    // Predicated region
    $region6: #{growth_nn_forward.1} parent=1 // pred_check
      _
    $region7: #{growth_nn_forward.1} parent=1 // pred_check_branch
      %38 = sbr.rel (0) target = $region9
    $region8: #{growth_nn_forward.1} parent=1 // pred_region
      %s40 = ssub.s32 256, 256
      %41 = vsyncadd [#allocation7], %s40
      %s42 = sshll.u32 [#allocation6], 4
      %s43 = int_to_ptr.vmem [resolvable:$true] %s42
      %48 = dma.hbm_to_vmem [thread:$0]  %s1, 256, %s43, [#allocation7], 128, 128, 8
    $region9: #{growth_nn_forward.1} parent=1 // pred_fallthru
      _
    // Predicated region
    $region10: #{growth_nn_forward.1} parent=1 // pred_check
      _
    $region11: #{growth_nn_forward.1} parent=1 // pred_check_branch
      %50 = sbr.rel (0) target = $region13
    $region12: #{growth_nn_forward.1} parent=1 // pred_region
      %s52 = ssub.s32 16, 16
      %53 = vsyncadd [#allocation7], %s52
      %s55 = sshll.u32 [#allocation8], 4
      %s56 = int_to_ptr.vmem [resolvable:$true] %s55
      %58 = dma.hbm_to_vmem [thread:$0]  %s2, 16, %s56, [#allocation7]
    $region13: #{growth_nn_forward.1} parent=1 // pred_fallthru
      _
    // Predicated region
    $region14: #{growth_nn_forward.1} parent=1 // pred_check
      _
    $region15: #{growth_nn_forward.1} parent=1 // pred_check_branch
      %60 = sbr.rel (0) target = $region17
    $region16: #{growth_nn_forward.1} parent=1 // pred_region
      %s62 = ssub.s32 1024, 1024
      %63 = vsyncadd [#allocation10], %s62
      %s64 = sshll.u32 [#allocation9], 4
      %s65 = int_to_ptr.vmem [resolvable:$true] %s64
      %70 = dma.hbm_to_vmem [thread:$0]  %s3, 1024, %s65, [#allocation10], 128, 128, 8
    $region17: #{growth_nn_forward.1} parent=1 // pred_fallthru
      _
    // Predicated region
    $region18: #{growth_nn_forward.1} parent=1 // pred_check
      _
    $region19: #{growth_nn_forward.1} parent=1 // pred_check_branch
      %72 = sbr.rel (0) target = $region21
    $region20: #{growth_nn_forward.1} parent=1 // pred_region
      %s74 = ssub.s32 16, 16
      %75 = vsyncadd [#allocation10], %s74
      %s77 = sshll.u32 [#allocation11], 4
      %s78 = int_to_ptr.vmem [resolvable:$true] %s77
      %80 = dma.hbm_to_vmem [thread:$0]  %s4, 16, %s78, [#allocation10]
    $region21: #{growth_nn_forward.1} parent=1 // pred_fallthru
      _
    // Predicated region
    $region22: #{growth_nn_forward.1} parent=1 // pred_check
      _
    $region23: #{growth_nn_forward.1} parent=1 // pred_check_branch
      %82 = sbr.rel (0) target = $region25
    $region24: #{growth_nn_forward.1} parent=1 // pred_region
      _
    $region25: #{growth_nn_forward.1} parent=1 // pred_fallthru
      _
    // Predicated region
    $region26: #{growth_nn_forward.1} parent=1 // pred_check
      _
    $region27: #{growth_nn_forward.1} parent=1 // pred_check_branch
      %84 = sbr.rel (0) target = $region29
    $region28: #{growth_nn_forward.1} parent=1 // pred_region
      _
    $region29: #{growth_nn_forward.1} parent=1 // pred_fallthru
      _
    // Predicated region
    $region30: #{growth_nn_forward.1} parent=1 // pred_check
      _
    $region31: #{growth_nn_forward.1} parent=1 // pred_check_branch
      %86 = sbr.rel (0) target = $region33
    $region32: #{growth_nn_forward.1} parent=1 // pred_region
      %s88 = ssub.s32 4096, 4096
      %89 = vsyncadd [#allocation13], %s88
      %s90 = sshll.u32 [#allocation12], 4
      %s91 = int_to_ptr.vmem [resolvable:$true] %s90
      %96 = dma.hbm_to_vmem [thread:$0]  %s7, 4096, %s91, [#allocation13], 128, 128, 8
    $region33: #{growth_nn_forward.1} parent=1 // pred_fallthru
      _
    // Predicated region
    $region34: #{growth_nn_forward.1} parent=1 // pred_check
      _
    $region35: #{growth_nn_forward.1} parent=1 // pred_check_branch
      %98 = sbr.rel (0) target = $region37
    $region36: #{growth_nn_forward.1} parent=1 // pred_region
      _
    $region37: #{growth_nn_forward.1} parent=1 // pred_fallthru
      _
    // Predicated region
    $region38: #{growth_nn_forward.1} parent=1 // pred_check
      _
    $region39: #{growth_nn_forward.1} parent=1 // pred_check_branch
      %100 = sbr.rel (0) target = $region41
    $region40: #{growth_nn_forward.1} parent=1 // pred_region
      _
    $region41: #{growth_nn_forward.1} parent=1 // pred_fallthru
      _
    // Predicated region
    $region42: #{growth_nn_forward.1} parent=1 // pred_check
      _
    $region43: #{growth_nn_forward.1} parent=1 // pred_check_branch
      %102 = sbr.rel (0) target = $region45
    $region44: #{growth_nn_forward.1} parent=1 // pred_region
      _
    $region45: #{growth_nn_forward.1} parent=1 // pred_fallthru
      _
    // Predicated region
    $region46: #{growth_nn_forward.1} parent=1 // pred_check
      _
    $region47: #{growth_nn_forward.1} parent=1 // pred_check_branch
      %104 = sbr.rel (0) target = $region49
    $region48: #{growth_nn_forward.1} parent=1 // pred_region
      _
    $region49: #{growth_nn_forward.1} parent=1 // pred_fallthru
      _
    // Predicated region
    $region50: #{growth_nn_forward.1} parent=1 // pred_check
      _
    $region51: #{growth_nn_forward.1} parent=1 // pred_check_branch
      %106 = sbr.rel (0) target = $region53
    $region52: #{growth_nn_forward.1} parent=1 // pred_region
      _
    $region53: #{growth_nn_forward.1} parent=1 // pred_fallthru
      _
    // Predicated region
    $region54: #{growth_nn_forward.1} parent=1 // pred_check
      _
    $region55: #{growth_nn_forward.1} parent=1 // pred_check_branch
      %108 = sbr.rel (0) target = $region57
    $region56: #{growth_nn_forward.1} parent=1 // pred_region
      _
    $region57: #{growth_nn_forward.1} parent=1 // pred_fallthru
      _
    // Predicated region
    $region58: #{growth_nn_forward.1} parent=1 // pred_check
      _
    $region59: #{growth_nn_forward.1} parent=1 // pred_check_branch
      %110 = sbr.rel (0) target = $region61
    $region60: #{growth_nn_forward.1} parent=1 // pred_region
      _
    $region61: #{growth_nn_forward.1} parent=1 // pred_fallthru
      _
    // Predicated region
    $region62: #{growth_nn_forward.1} parent=1 // pred_check
      _
    $region63: #{growth_nn_forward.1} parent=1 // pred_check_branch
      %112 = sbr.rel (0) target = $region65
    $region64: #{growth_nn_forward.1} parent=1 // pred_region
      %113 = dma.done [#allocation4], 128
    $region65: #{growth_nn_forward.1} parent=1 // pred_fallthru
      _
    // Predicated region
    $region66: #{growth_nn_forward.1} parent=1 // pred_check
      _
    $region67: #{growth_nn_forward.1} parent=1 // pred_check_branch
      %115 = sbr.rel (0) target = $region69
    $region68: #{growth_nn_forward.1} parent=1 // pred_region
      %116 = dma.done [#allocation7], 256
    $region69: #{growth_nn_forward.1} parent=1 // pred_fallthru
      _
    // Predicated region
    $region70: #{growth_nn_forward.1} parent=1 // pred_check
      _
    $region71: #{growth_nn_forward.1} parent=1 // pred_check_branch
      %118 = sbr.rel (0) target = $region73
    $region72: #{growth_nn_forward.1} parent=1 // pred_region
      %119 = dma.done [#allocation7], 16
    $region73: #{growth_nn_forward.1} parent=1 // pred_fallthru
      _
    // Predicated region
    $region74: #{growth_nn_forward.1} parent=1 // pred_check
      _
    $region75: #{growth_nn_forward.1} parent=1 // pred_check_branch
      %121 = sbr.rel (0) target = $region77
    $region76: #{growth_nn_forward.1} parent=1 // pred_region
      %122 = dma.done [#allocation10], 1024
    $region77: #{growth_nn_forward.1} parent=1 // pred_fallthru
      _
    // Predicated region
    $region78: #{growth_nn_forward.1} parent=1 // pred_check
      _
    $region79: #{growth_nn_forward.1} parent=1 // pred_check_branch
      %124 = sbr.rel (0) target = $region81
    $region80: #{growth_nn_forward.1} parent=1 // pred_region
      %125 = dma.done [#allocation10], 16
    $region81: #{growth_nn_forward.1} parent=1 // pred_fallthru
      _
    // Predicated region
    $region82: #{growth_nn_forward.1} parent=1 // pred_check
      _
    $region83: #{growth_nn_forward.1} parent=1 // pred_check_branch
      %127 = sbr.rel (0) target = $region85
    $region84: #{growth_nn_forward.1} parent=1 // pred_region
      %128 = dma.done [#allocation13], 4096
    $region85: #{growth_nn_forward.1} parent=1 // pred_fallthru
      _
    %v129 = vld [vmem:[#allocation3] sm:$0xff]
    %v130 = vld [vmem:[#allocation6] sm:$0xff]
    %v131 = vld [vmem:[#allocation6 + $0x8] sm:$0xff]
    %v132 = vld [vmem:[#allocation8] sm:$0x1]
    %v134 = vlaneseq
    %v135 = vshrl.u32 %v134, 7
    %v136 = vsub.s32 0, %v135
    %v137 = vrot.slane %v132, %v136
    %vm139 = vcmask 130048
    %v141 = vsel %vm139, %v129, 0
    %143 = vmatprep.subr.mxu0 0.0
    %144 = vmatpush1.msra.mxu0 %v130
    %145 = vmatprep.subr.mxu0 0.0
    %146 = vmatpush1.msra.mxu0 %v131
    %147 = vmatprep.subr.mxu0 0.0
    %148 = vmatpush1.msra.mxu0 0.0
    %149 = vmatprep.subr.mxu0 0.0
    %150 = vmatpush1.msra.mxu0 0.0
    %151 = vmatprep.subr.mxu0 0.0
    %152 = vmatpush1.msra.mxu0 0.0
    %153 = vmatprep.subr.mxu0 0.0
    %154 = vmatpush1.msra.mxu0 0.0
    %155 = vmatprep.subr.mxu0 0.0
    %156 = vmatpush1.msra.mxu0 0.0
    %157 = vmatprep.subr.mxu0 0.0
    %158 = vmatpush1.msra.mxu0 0.0
    %159 = vmatprep.subr.mxu0 0.0
    %160 = vmatpush1.msra.mxu0 0.0
    %161 = vmatprep.subr.mxu0 0.0
    %162 = vmatpush1.msra.mxu0 0.0
    %163 = vmatprep.subr.mxu0 0.0
    %164 = vmatpush1.msra.mxu0 0.0
    %165 = vmatprep.subr.mxu0 0.0
    %166 = vmatpush1.msra.mxu0 0.0
    %167 = vmatprep.subr.mxu0 0.0
    %168 = vmatpush1.msra.mxu0 0.0
    %169 = vmatprep.subr.mxu0 0.0
    %170 = vmatpush1.msra.mxu0 0.0
    %171 = vmatprep.subr.mxu0 0.0
    %172 = vmatpush1.msra.mxu0 0.0
    %173 = vmatprep.subr.mxu0 0.0
    %174 = vmatpush1.msra.mxu0 0.0
    %175 = vmatprep.subr.mxu0 0.0
    %176 = vmatpush1.msra.mxu0 0.0
    %177 = vmatprep.subr.mxu0 0.0
    %178 = vmatpush1.msra.mxu0 0.0
    %179 = vmatprep.subr.mxu0 0.0
    %180 = vmatpush1.msra.mxu0 0.0
    %181 = vmatprep.subr.mxu0 0.0
    %182 = vmatpush1.msra.mxu0 0.0
    %183 = vmatprep.subr.mxu0 0.0
    %184 = vmatpush1.msra.mxu0 0.0
    %185 = vmatprep.subr.mxu0 0.0
    %186 = vmatpush1.msra.mxu0 0.0
    %187 = vmatprep.subr.mxu0 0.0
    %188 = vmatpush1.msra.mxu0 0.0
    %189 = vmatprep.subr.mxu0 0.0
    %190 = vmatpush1.msra.mxu0 0.0
    %191 = vmatprep.subr.mxu0 0.0
    %192 = vmatpush1.msra.mxu0 0.0
    %193 = vmatprep.subr.mxu0 0.0
    %194 = vmatpush1.msra.mxu0 0.0
    %195 = vmatprep.subr.mxu0 0.0
    %196 = vmatpush1.msra.mxu0 0.0
    %197 = vmatprep.subr.mxu0 0.0
    %198 = vmatpush1.msra.mxu0 0.0
    %199 = vmatprep.subr.mxu0 0.0
    %200 = vmatpush1.msra.mxu0 0.0
    %201 = vmatprep.subr.mxu0 0.0
    %202 = vmatpush1.msra.mxu0 0.0
    %203 = vmatprep.subr.mxu0 0.0
    %204 = vmatpush1.msra.mxu0 0.0
    %205 = vmatprep.subr.mxu0 0.0
    %206 = vmatpush1.msra.mxu0 0.0
    %207 = vmatprep.mubr.f32.mxu0 0.0
    %208 = vmatmul.mubr.f32.gmra.mrb[0].mxu0 %v141
    %v209 = vpop.f32.mrb[0].mxu0
    %v210 = vadd.f32 %v137, %v209
    %v211 = vpop.f32.mrb[0].mxu0
    %212 = vdwg.mxu0
    %v213 = vmax.f32 %v210, 0.0
    %v214 = vld [vmem:[#allocation9] sm:$0xff]
    %v215 = vld [vmem:[#allocation9 + $0x8] sm:$0xff]
    %v216 = vld [vmem:[#allocation9 + $0x10] sm:$0xff]
    %v217 = vld [vmem:[#allocation9 + $0x18] sm:$0xff]
    %v218 = vld [vmem:[#allocation9 + $0x20] sm:$0xff]
    %v219 = vld [vmem:[#allocation9 + $0x28] sm:$0xff]
    %v220 = vld [vmem:[#allocation9 + $0x30] sm:$0xff]
    %v221 = vld [vmem:[#allocation9 + $0x38] sm:$0xff]
    %v222 = vld [vmem:[#allocation11] sm:$0x1]
    %v224 = vlaneseq
    %v225 = vshrl.u32 %v224, 7
    %v226 = vsub.s32 0, %v225
    %v227 = vrot.slane %v222, %v226
    %vm229 = vcmask 523264
    %v231 = vsel %vm229, %v213, 0
    %233 = vmatprep.subr.mxu0 0.0
    %234 = vmatpush1.msra.mxu0 %v214
    %235 = vmatprep.subr.mxu0 0.0
    %236 = vmatpush1.msra.mxu0 %v215
    %237 = vmatprep.subr.mxu0 0.0
    %238 = vmatpush1.msra.mxu0 %v216
    %239 = vmatprep.subr.mxu0 0.0
    %240 = vmatpush1.msra.mxu0 %v217
    %241 = vmatprep.subr.mxu0 0.0
    %242 = vmatpush1.msra.mxu0 %v218
    %243 = vmatprep.subr.mxu0 0.0
    %244 = vmatpush1.msra.mxu0 %v219
    %245 = vmatprep.subr.mxu0 0.0
    %246 = vmatpush1.msra.mxu0 %v220
    %247 = vmatprep.subr.mxu0 0.0
    %248 = vmatpush1.msra.mxu0 %v221
    %249 = vmatprep.subr.mxu0 0.0
    %250 = vmatpush1.msra.mxu0 0.0
    %251 = vmatprep.subr.mxu0 0.0
    %252 = vmatpush1.msra.mxu0 0.0
    %253 = vmatprep.subr.mxu0 0.0
    %254 = vmatpush1.msra.mxu0 0.0
    %255 = vmatprep.subr.mxu0 0.0
    %256 = vmatpush1.msra.mxu0 0.0
    %257 = vmatprep.subr.mxu0 0.0
    %258 = vmatpush1.msra.mxu0 0.0
    %259 = vmatprep.subr.mxu0 0.0
    %260 = vmatpush1.msra.mxu0 0.0
    %261 = vmatprep.subr.mxu0 0.0
    %262 = vmatpush1.msra.mxu0 0.0
    %263 = vmatprep.subr.mxu0 0.0
    %264 = vmatpush1.msra.mxu0 0.0
    %265 = vmatprep.subr.mxu0 0.0
    %266 = vmatpush1.msra.mxu0 0.0
    %267 = vmatprep.subr.mxu0 0.0
    %268 = vmatpush1.msra.mxu0 0.0
    %269 = vmatprep.subr.mxu0 0.0
    %270 = vmatpush1.msra.mxu0 0.0
    %271 = vmatprep.subr.mxu0 0.0
    %272 = vmatpush1.msra.mxu0 0.0
    %273 = vmatprep.subr.mxu0 0.0
    %274 = vmatpush1.msra.mxu0 0.0
    %275 = vmatprep.subr.mxu0 0.0
    %276 = vmatpush1.msra.mxu0 0.0
    %277 = vmatprep.subr.mxu0 0.0
    %278 = vmatpush1.msra.mxu0 0.0
    %279 = vmatprep.subr.mxu0 0.0
    %280 = vmatpush1.msra.mxu0 0.0
    %281 = vmatprep.subr.mxu0 0.0
    %282 = vmatpush1.msra.mxu0 0.0
    %283 = vmatprep.subr.mxu0 0.0
    %284 = vmatpush1.msra.mxu0 0.0
    %285 = vmatprep.subr.mxu0 0.0
    %286 = vmatpush1.msra.mxu0 0.0
    %287 = vmatprep.subr.mxu0 0.0
    %288 = vmatpush1.msra.mxu0 0.0
    %289 = vmatprep.subr.mxu0 0.0
    %290 = vmatpush1.msra.mxu0 0.0
    %291 = vmatprep.subr.mxu0 0.0
    %292 = vmatpush1.msra.mxu0 0.0
    %293 = vmatprep.subr.mxu0 0.0
    %294 = vmatpush1.msra.mxu0 0.0
    %295 = vmatprep.subr.mxu0 0.0
    %296 = vmatpush1.msra.mxu0 0.0
    %297 = vmatprep.mubr.f32.mxu0 0.0
    %298 = vmatmul.mubr.f32.gmra.mrb[0].mxu0 %v231
    %v299 = vpop.f32.mrb[0].mxu0
    %v300 = vadd.f32 %v227, %v299
    %v301 = vpop.f32.mrb[0].mxu0
    %302 = vdwg.mxu0
    %v303 = vmax.f32 %v300, 0.0
    %v304 = vld [vmem:[%s5] sm:$0xff]
    %v305 = vld [vmem:[%s5 + $0x8] sm:$0xff]
    %v306 = vld [vmem:[%s5 + $0x10] sm:$0xff]
    %v307 = vld [vmem:[%s5 + $0x18] sm:$0xff]
    %v308 = vld [vmem:[%s5 + $0x20] sm:$0xff]
    %v309 = vld [vmem:[%s5 + $0x28] sm:$0xff]
    %v310 = vld [vmem:[%s5 + $0x30] sm:$0xff]
    %v311 = vld [vmem:[%s5 + $0x38] sm:$0xff]
    %v312 = vld [vmem:[%s5 + $0x40] sm:$0xff]
    %v313 = vld [vmem:[%s5 + $0x48] sm:$0xff]
    %v314 = vld [vmem:[%s5 + $0x50] sm:$0xff]
    %v315 = vld [vmem:[%s5 + $0x58] sm:$0xff]
    %v316 = vld [vmem:[%s5 + $0x60] sm:$0xff]
    %v317 = vld [vmem:[%s5 + $0x68] sm:$0xff]
    %v318 = vld [vmem:[%s5 + $0x70] sm:$0xff]
    %v319 = vld [vmem:[%s5 + $0x78] sm:$0xff]
    %v320 = vld [vmem:[%s5 + $0x80] sm:$0xff]
    %v321 = vld [vmem:[%s5 + $0x88] sm:$0xff]
    %v322 = vld [vmem:[%s5 + $0x90] sm:$0xff]
    %v323 = vld [vmem:[%s5 + $0x98] sm:$0xff]
    %v324 = vld [vmem:[%s5 + $0xa0] sm:$0xff]
    %v325 = vld [vmem:[%s5 + $0xa8] sm:$0xff]
    %v326 = vld [vmem:[%s5 + $0xb0] sm:$0xff]
    %v327 = vld [vmem:[%s5 + $0xb8] sm:$0xff]
    %v328 = vld [vmem:[%s5 + $0xc0] sm:$0xff]
    %v329 = vld [vmem:[%s5 + $0xc8] sm:$0xff]
    %v330 = vld [vmem:[%s5 + $0xd0] sm:$0xff]
    %v331 = vld [vmem:[%s5 + $0xd8] sm:$0xff]
    %v332 = vld [vmem:[%s5 + $0xe0] sm:$0xff]
    %v333 = vld [vmem:[%s5 + $0xe8] sm:$0xff]
    %v334 = vld [vmem:[%s5 + $0xf0] sm:$0xff]
    %v335 = vld [vmem:[%s5 + $0xf8] sm:$0xff]
    %v336 = vld [vmem:[%s6] sm:$0x3]
    %v338 = vlaneseq
    %v339 = vshrl.u32 %v338, 7
    %v340 = vsub.s32 0, %v339
    %v341 = vrot.slane %v336, %v340
    %v342 = vlaneseq
    %v343 = vshrl.u32 %v342, 7
    %v344 = vsub.s32 1, %v343
    %v345 = vrot.slane %v336, %v344
    %348 = vmatprep.subr.mxu0 %v305
    %349 = vmatpush1.msra.mxu0 %v304
    %350 = vmatprep.subr.mxu0 %v307
    %351 = vmatpush1.msra.mxu0 %v306
    %352 = vmatprep.subr.mxu0 %v309
    %353 = vmatpush1.msra.mxu0 %v308
    %354 = vmatprep.subr.mxu0 %v311
    %355 = vmatpush1.msra.mxu0 %v310
    %356 = vmatprep.subr.mxu0 %v313
    %357 = vmatpush1.msra.mxu0 %v312
    %358 = vmatprep.subr.mxu0 %v315
    %359 = vmatpush1.msra.mxu0 %v314
    %360 = vmatprep.subr.mxu0 %v317
    %361 = vmatpush1.msra.mxu0 %v316
    %362 = vmatprep.subr.mxu0 %v319
    %363 = vmatpush1.msra.mxu0 %v318
    %364 = vmatprep.subr.mxu0 %v321
    %365 = vmatpush1.msra.mxu0 %v320
    %366 = vmatprep.subr.mxu0 %v323
    %367 = vmatpush1.msra.mxu0 %v322
    %368 = vmatprep.subr.mxu0 %v325
    %369 = vmatpush1.msra.mxu0 %v324
    %370 = vmatprep.subr.mxu0 %v327
    %371 = vmatpush1.msra.mxu0 %v326
    %372 = vmatprep.subr.mxu0 %v329
    %373 = vmatpush1.msra.mxu0 %v328
    %374 = vmatprep.subr.mxu0 %v331
    %375 = vmatpush1.msra.mxu0 %v330
    %376 = vmatprep.subr.mxu0 %v333
    %377 = vmatpush1.msra.mxu0 %v332
    %378 = vmatprep.subr.mxu0 %v335
    %379 = vmatpush1.msra.mxu0 %v334
    %380 = vmatprep.subr.mxu0 0.0
    %381 = vmatpush1.msra.mxu0 0.0
    %382 = vmatprep.subr.mxu0 0.0
    %383 = vmatpush1.msra.mxu0 0.0
    %384 = vmatprep.subr.mxu0 0.0
    %385 = vmatpush1.msra.mxu0 0.0
    %386 = vmatprep.subr.mxu0 0.0
    %387 = vmatpush1.msra.mxu0 0.0
    %388 = vmatprep.subr.mxu0 0.0
    %389 = vmatpush1.msra.mxu0 0.0
    %390 = vmatprep.subr.mxu0 0.0
    %391 = vmatpush1.msra.mxu0 0.0
    %392 = vmatprep.subr.mxu0 0.0
    %393 = vmatpush1.msra.mxu0 0.0
    %394 = vmatprep.subr.mxu0 0.0
    %395 = vmatpush1.msra.mxu0 0.0
    %396 = vmatprep.subr.mxu0 0.0
    %397 = vmatpush1.msra.mxu0 0.0
    %398 = vmatprep.subr.mxu0 0.0
    %399 = vmatpush1.msra.mxu0 0.0
    %400 = vmatprep.subr.mxu0 0.0
    %401 = vmatpush1.msra.mxu0 0.0
    %402 = vmatprep.subr.mxu0 0.0
    %403 = vmatpush1.msra.mxu0 0.0
    %404 = vmatprep.subr.mxu0 0.0
    %405 = vmatpush1.msra.mxu0 0.0
    %406 = vmatprep.subr.mxu0 0.0
    %407 = vmatpush1.msra.mxu0 0.0
    %408 = vmatprep.subr.mxu0 0.0
    %409 = vmatpush1.msra.mxu0 0.0
    %410 = vmatprep.subr.mxu0 0.0
    %411 = vmatpush1.msra.mxu0 0.0
    %412 = vmatprep.mubr.f32.mxu0 0.0
    %413 = vmatmul.mubr.f32.gmra.mrb[0].mxu0 %v303
    %v414 = vpop.f32.mrb[0].mxu0
    %v415 = vadd.f32 %v341, %v414
    %v416 = vpop.f32.mrb[0].mxu0
    %v417 = vadd.f32 %v345, %v416
    %418 = vdwg.mxu0
    %v419 = vmax.f32 %v415, 0.0
    %v420 = vmax.f32 %v417, 0.0
    %v421 = vld [vmem:[#allocation12] sm:$0xff]
    %v422 = vld [vmem:[#allocation12 + $0x8] sm:$0xff]
    %v423 = vld [vmem:[#allocation12 + $0x10] sm:$0xff]
    %v424 = vld [vmem:[#allocation12 + $0x18] sm:$0xff]
    %v425 = vld [vmem:[#allocation12 + $0x20] sm:$0xff]
    %v426 = vld [vmem:[#allocation12 + $0x28] sm:$0xff]
    %v427 = vld [vmem:[#allocation12 + $0x30] sm:$0xff]
    %v428 = vld [vmem:[#allocation12 + $0x38] sm:$0xff]
    %v429 = vld [vmem:[#allocation12 + $0x40] sm:$0xff]
    %v430 = vld [vmem:[#allocation12 + $0x48] sm:$0xff]
    %v431 = vld [vmem:[#allocation12 + $0x50] sm:$0xff]
    %v432 = vld [vmem:[#allocation12 + $0x58] sm:$0xff]
    %v433 = vld [vmem:[#allocation12 + $0x60] sm:$0xff]
    %v434 = vld [vmem:[#allocation12 + $0x68] sm:$0xff]
    %v435 = vld [vmem:[#allocation12 + $0x70] sm:$0xff]
    %v436 = vld [vmem:[#allocation12 + $0x78] sm:$0xff]
    %v437 = vld [vmem:[#allocation12 + $0x80] sm:$0xff]
    %v438 = vld [vmem:[#allocation12 + $0x88] sm:$0xff]
    %v439 = vld [vmem:[#allocation12 + $0x90] sm:$0xff]
    %v440 = vld [vmem:[#allocation12 + $0x98] sm:$0xff]
    %v441 = vld [vmem:[#allocation12 + $0xa0] sm:$0xff]
    %v442 = vld [vmem:[#allocation12 + $0xa8] sm:$0xff]
    %v443 = vld [vmem:[#allocation12 + $0xb0] sm:$0xff]
    %v444 = vld [vmem:[#allocation12 + $0xb8] sm:$0xff]
    %v445 = vld [vmem:[#allocation12 + $0xc0] sm:$0xff]
    %v446 = vld [vmem:[#allocation12 + $0xc8] sm:$0xff]
    %v447 = vld [vmem:[#allocation12 + $0xd0] sm:$0xff]
    %v448 = vld [vmem:[#allocation12 + $0xd8] sm:$0xff]
    %v449 = vld [vmem:[#allocation12 + $0xe0] sm:$0xff]
    %v450 = vld [vmem:[#allocation12 + $0xe8] sm:$0xff]
    %v451 = vld [vmem:[#allocation12 + $0xf0] sm:$0xff]
    %v452 = vld [vmem:[#allocation12 + $0xf8] sm:$0xff]
    %v453 = vld [vmem:[%s8] sm:$0x1]
    %v455 = vlaneseq
    %v456 = vshrl.u32 %v455, 7
    %v457 = vsub.s32 0, %v456
    %v458 = vrot.slane %v453, %v457
    %460 = vmatprep.subr.mxu0 0.0
    %461 = vmatpush1.msra.mxu0 %v421
    %462 = vmatprep.subr.mxu0 0.0
    %463 = vmatpush1.msra.mxu0 %v422
    %464 = vmatprep.subr.mxu0 0.0
    %465 = vmatpush1.msra.mxu0 %v423
    %466 = vmatprep.subr.mxu0 0.0
    %467 = vmatpush1.msra.mxu0 %v424
    %468 = vmatprep.subr.mxu0 0.0
    %469 = vmatpush1.msra.mxu0 %v425
    %470 = vmatprep.subr.mxu0 0.0
    %471 = vmatpush1.msra.mxu0 %v426
    %472 = vmatprep.subr.mxu0 0.0
    %473 = vmatpush1.msra.mxu0 %v427
    %474 = vmatprep.subr.mxu0 0.0
    %475 = vmatpush1.msra.mxu0 %v428
    %476 = vmatprep.subr.mxu0 0.0
    %477 = vmatpush1.msra.mxu0 %v429
    %478 = vmatprep.subr.mxu0 0.0
    %479 = vmatpush1.msra.mxu0 %v430
    %480 = vmatprep.subr.mxu0 0.0
    %481 = vmatpush1.msra.mxu0 %v431
    %482 = vmatprep.subr.mxu0 0.0
    %483 = vmatpush1.msra.mxu0 %v432
    %484 = vmatprep.subr.mxu0 0.0
    %485 = vmatpush1.msra.mxu0 %v433
    %486 = vmatprep.subr.mxu0 0.0
    %487 = vmatpush1.msra.mxu0 %v434
    %488 = vmatprep.subr.mxu0 0.0
    %489 = vmatpush1.msra.mxu0 %v435
    %490 = vmatprep.subr.mxu0 0.0
    %491 = vmatpush1.msra.mxu0 %v436
    %492 = vmatprep.subr.mxu0 0.0
    %493 = vmatpush1.msra.mxu0 %v437
    %494 = vmatprep.subr.mxu0 0.0
    %495 = vmatpush1.msra.mxu0 %v438
    %496 = vmatprep.subr.mxu0 0.0
    %497 = vmatpush1.msra.mxu0 %v439
    %498 = vmatprep.subr.mxu0 0.0
    %499 = vmatpush1.msra.mxu0 %v440
    %500 = vmatprep.subr.mxu0 0.0
    %501 = vmatpush1.msra.mxu0 %v441
    %502 = vmatprep.subr.mxu0 0.0
    %503 = vmatpush1.msra.mxu0 %v442
    %504 = vmatprep.subr.mxu0 0.0
    %505 = vmatpush1.msra.mxu0 %v443
    %506 = vmatprep.subr.mxu0 0.0
    %507 = vmatpush1.msra.mxu0 %v444
    %508 = vmatprep.subr.mxu0 0.0
    %509 = vmatpush1.msra.mxu0 %v445
    %510 = vmatprep.subr.mxu0 0.0
    %511 = vmatpush1.msra.mxu0 %v446
    %512 = vmatprep.subr.mxu0 0.0
    %513 = vmatpush1.msra.mxu0 %v447
    %514 = vmatprep.subr.mxu0 0.0
    %515 = vmatpush1.msra.mxu0 %v448
    %516 = vmatprep.subr.mxu0 0.0
    %517 = vmatpush1.msra.mxu0 %v449
    %518 = vmatprep.subr.mxu0 0.0
    %519 = vmatpush1.msra.mxu0 %v450
    %520 = vmatprep.subr.mxu0 0.0
    %521 = vmatpush1.msra.mxu0 %v451
    %522 = vmatprep.subr.mxu0 0.0
    %523 = vmatpush1.msra.mxu0 %v452
    %524 = vmatprep.mubr.f32.mxu0 %v420
    %525 = vmatmul.mubr.f32.gmra.mrb[0].mxu0 %v419
    %v526 = vpop.f32.mrb[0].mxu0
    %v527 = vadd.f32 %v458, %v526
    %v528 = vpop.f32.mrb[0].mxu0
    %529 = vdwg.mxu0
    %v530 = vmax.f32 %v527, 0.0
    %v531 = vld [vmem:[%s9] sm:$0xff]
    %v532 = vld [vmem:[%s9 + $0x8] sm:$0xff]
    %v533 = vld [vmem:[%s9 + $0x10] sm:$0xff]
    %v534 = vld [vmem:[%s9 + $0x18] sm:$0xff]
    %v535 = vld [vmem:[%s9 + $0x20] sm:$0xff]
    %v536 = vld [vmem:[%s9 + $0x28] sm:$0xff]
    %v537 = vld [vmem:[%s9 + $0x30] sm:$0xff]
    %v538 = vld [vmem:[%s9 + $0x38] sm:$0xff]
    %v539 = vld [vmem:[%s9 + $0x40] sm:$0xff]
    %v540 = vld [vmem:[%s9 + $0x48] sm:$0xff]
    %v541 = vld [vmem:[%s9 + $0x50] sm:$0xff]
    %v542 = vld [vmem:[%s9 + $0x58] sm:$0xff]
    %v543 = vld [vmem:[%s9 + $0x60] sm:$0xff]
    %v544 = vld [vmem:[%s9 + $0x68] sm:$0xff]
    %v545 = vld [vmem:[%s9 + $0x70] sm:$0xff]
    %v546 = vld [vmem:[%s9 + $0x78] sm:$0xff]
    %v547 = vld [vmem:[%s10] sm:$0x1]
    %v549 = vlaneseq
    %v550 = vshrl.u32 %v549, 7
    %v551 = vsub.s32 0, %v550
    %v552 = vrot.slane %v547, %v551
    %554 = vmatprep.subr.mxu0 0.0
    %555 = vmatpush1.msra.mxu0 %v531
    %556 = vmatprep.subr.mxu0 0.0
    %557 = vmatpush1.msra.mxu0 %v532
    %558 = vmatprep.subr.mxu0 0.0
    %559 = vmatpush1.msra.mxu0 %v533
    %560 = vmatprep.subr.mxu0 0.0
    %561 = vmatpush1.msra.mxu0 %v534
    %562 = vmatprep.subr.mxu0 0.0
    %563 = vmatpush1.msra.mxu0 %v535
    %564 = vmatprep.subr.mxu0 0.0
    %565 = vmatpush1.msra.mxu0 %v536
    %566 = vmatprep.subr.mxu0 0.0
    %567 = vmatpush1.msra.mxu0 %v537
    %568 = vmatprep.subr.mxu0 0.0
    %569 = vmatpush1.msra.mxu0 %v538
    %570 = vmatprep.subr.mxu0 0.0
    %571 = vmatpush1.msra.mxu0 %v539
    %572 = vmatprep.subr.mxu0 0.0
    %573 = vmatpush1.msra.mxu0 %v540
    %574 = vmatprep.subr.mxu0 0.0
    %575 = vmatpush1.msra.mxu0 %v541
    %576 = vmatprep.subr.mxu0 0.0
    %577 = vmatpush1.msra.mxu0 %v542
    %578 = vmatprep.subr.mxu0 0.0
    %579 = vmatpush1.msra.mxu0 %v543
    %580 = vmatprep.subr.mxu0 0.0
    %581 = vmatpush1.msra.mxu0 %v544
    %582 = vmatprep.subr.mxu0 0.0
    %583 = vmatpush1.msra.mxu0 %v545
    %584 = vmatprep.subr.mxu0 0.0
    %585 = vmatpush1.msra.mxu0 %v546
    %586 = vmatprep.subr.mxu0 0.0
    %587 = vmatpush1.msra.mxu0 0.0
    %588 = vmatprep.subr.mxu0 0.0
    %589 = vmatpush1.msra.mxu0 0.0
    %590 = vmatprep.subr.mxu0 0.0
    %591 = vmatpush1.msra.mxu0 0.0
    %592 = vmatprep.subr.mxu0 0.0
    %593 = vmatpush1.msra.mxu0 0.0
    %594 = vmatprep.subr.mxu0 0.0
    %595 = vmatpush1.msra.mxu0 0.0
    %596 = vmatprep.subr.mxu0 0.0
    %597 = vmatpush1.msra.mxu0 0.0
    %598 = vmatprep.subr.mxu0 0.0
    %599 = vmatpush1.msra.mxu0 0.0
    %600 = vmatprep.subr.mxu0 0.0
    %601 = vmatpush1.msra.mxu0 0.0
    %602 = vmatprep.subr.mxu0 0.0
    %603 = vmatpush1.msra.mxu0 0.0
    %604 = vmatprep.subr.mxu0 0.0
    %605 = vmatpush1.msra.mxu0 0.0
    %606 = vmatprep.subr.mxu0 0.0
    %607 = vmatpush1.msra.mxu0 0.0
    %608 = vmatprep.subr.mxu0 0.0
    %609 = vmatpush1.msra.mxu0 0.0
    %610 = vmatprep.subr.mxu0 0.0
    %611 = vmatpush1.msra.mxu0 0.0
    %612 = vmatprep.subr.mxu0 0.0
    %613 = vmatpush1.msra.mxu0 0.0
    %614 = vmatprep.subr.mxu0 0.0
    %615 = vmatpush1.msra.mxu0 0.0
    %616 = vmatprep.subr.mxu0 0.0
    %617 = vmatpush1.msra.mxu0 0.0
    %618 = vmatprep.mubr.f32.mxu0 0.0
    %619 = vmatmul.mubr.f32.gmra.mrb[0].mxu0 %v530
    %v620 = vpop.f32.mrb[0].mxu0
    %v621 = vadd.f32 %v552, %v620
    %v622 = vpop.f32.mrb[0].mxu0
    %623 = vdwg.mxu0
    %v624 = vmax.f32 %v621, 0.0
    %v625 = vld [vmem:[%s11] sm:$0xff]
    %v626 = vld [vmem:[%s11 + $0x8] sm:$0xff]
    %v627 = vld [vmem:[%s11 + $0x10] sm:$0xff]
    %v628 = vld [vmem:[%s11 + $0x18] sm:$0xff]
    %v629 = vld [vmem:[%s11 + $0x20] sm:$0xff]
    %v630 = vld [vmem:[%s11 + $0x28] sm:$0xff]
    %v631 = vld [vmem:[%s11 + $0x30] sm:$0xff]
    %v632 = vld [vmem:[%s11 + $0x38] sm:$0xff]
    %v633 = vld [vmem:[%s12] sm:$0x1]
    %v635 = vlaneseq
    %v636 = vshrl.u32 %v635, 7
    %v637 = vsub.s32 0, %v636
    %v638 = vrot.slane %v633, %v637
    %v641 = vsel %vm229, %v624, 0
    %643 = vmatprep.subr.mxu0 0.0
    %644 = vmatpush1.msra.mxu0 %v625
    %645 = vmatprep.subr.mxu0 0.0
    %646 = vmatpush1.msra.mxu0 %v626
    %647 = vmatprep.subr.mxu0 0.0
    %648 = vmatpush1.msra.mxu0 %v627
    %649 = vmatprep.subr.mxu0 0.0
    %650 = vmatpush1.msra.mxu0 %v628
    %651 = vmatprep.subr.mxu0 0.0
    %652 = vmatpush1.msra.mxu0 %v629
    %653 = vmatprep.subr.mxu0 0.0
    %654 = vmatpush1.msra.mxu0 %v630
    %655 = vmatprep.subr.mxu0 0.0
    %656 = vmatpush1.msra.mxu0 %v631
    %657 = vmatprep.subr.mxu0 0.0
    %658 = vmatpush1.msra.mxu0 %v632
    %659 = vmatprep.subr.mxu0 0.0
    %660 = vmatpush1.msra.mxu0 0.0
    %661 = vmatprep.subr.mxu0 0.0
    %662 = vmatpush1.msra.mxu0 0.0
    %663 = vmatprep.subr.mxu0 0.0
    %664 = vmatpush1.msra.mxu0 0.0
    %665 = vmatprep.subr.mxu0 0.0
    %666 = vmatpush1.msra.mxu0 0.0
    %667 = vmatprep.subr.mxu0 0.0
    %668 = vmatpush1.msra.mxu0 0.0
    %669 = vmatprep.subr.mxu0 0.0
    %670 = vmatpush1.msra.mxu0 0.0
    %671 = vmatprep.subr.mxu0 0.0
    %672 = vmatpush1.msra.mxu0 0.0
    %673 = vmatprep.subr.mxu0 0.0
    %674 = vmatpush1.msra.mxu0 0.0
    %675 = vmatprep.subr.mxu0 0.0
    %676 = vmatpush1.msra.mxu0 0.0
    %677 = vmatprep.subr.mxu0 0.0
    %678 = vmatpush1.msra.mxu0 0.0
    %679 = vmatprep.subr.mxu0 0.0
    %680 = vmatpush1.msra.mxu0 0.0
    %681 = vmatprep.subr.mxu0 0.0
    %682 = vmatpush1.msra.mxu0 0.0
    %683 = vmatprep.subr.mxu0 0.0
    %684 = vmatpush1.msra.mxu0 0.0
    %685 = vmatprep.subr.mxu0 0.0
    %686 = vmatpush1.msra.mxu0 0.0
    %687 = vmatprep.subr.mxu0 0.0
    %688 = vmatpush1.msra.mxu0 0.0
    %689 = vmatprep.subr.mxu0 0.0
    %690 = vmatpush1.msra.mxu0 0.0
    %691 = vmatprep.subr.mxu0 0.0
    %692 = vmatpush1.msra.mxu0 0.0
    %693 = vmatprep.subr.mxu0 0.0
    %694 = vmatpush1.msra.mxu0 0.0
    %695 = vmatprep.subr.mxu0 0.0
    %696 = vmatpush1.msra.mxu0 0.0
    %697 = vmatprep.subr.mxu0 0.0
    %698 = vmatpush1.msra.mxu0 0.0
    %699 = vmatprep.subr.mxu0 0.0
    %700 = vmatpush1.msra.mxu0 0.0
    %701 = vmatprep.subr.mxu0 0.0
    %702 = vmatpush1.msra.mxu0 0.0
    %703 = vmatprep.subr.mxu0 0.0
    %704 = vmatpush1.msra.mxu0 0.0
    %705 = vmatprep.subr.mxu0 0.0
    %706 = vmatpush1.msra.mxu0 0.0
    %707 = vmatprep.mubr.f32.mxu0 0.0
    %708 = vmatmul.mubr.f32.gmra.mrb[0].mxu0 %v641
    %v709 = vpop.f32.mrb[0].mxu0
    %v710 = vadd.f32 %v638, %v709
    %v711 = vpop.f32.mrb[0].mxu0
    %712 = vdwg.mxu0
    %v713 = vmax.f32 %v710, 0.0
    %v714 = vld [vmem:[%s13] sm:$0x1]
    %v716 = vlaneseq
    %v717 = vshrl.u32 %v716, 7
    %v718 = vsub.s32 0, %v717
    %v719 = vrot.slane %v714, %v718
    %v721 = vmul.f32 %v713, %v719
    %vm722 = vcmask 261120
    %v723 = vsel %vm722, %v721, 0.0
    %724 = vadd.xlane.f32.xlu0 %v723
    %v725 = vpop.xlane.xlu0 %724
    %v726 = vld [vmem:[#allocation2] sm:$0x1]
    %v728 = vlaneseq
    %v729 = vshrl.u32 %v728, 7
    %v730 = vsub.s32 0, %v729
    %v731 = vrot.slane %v726, %v730
    %v733 = vadd.f32 %v725, %v731
    %734 = vxpose.xlu0.b32.start [1/16] %v733, 128
    %735 = vxpose.xlu0.b32.cont [2/16] 0.0, 128
    %736 = vxpose.xlu0.b32.cont [3/16] 0.0, 128
    %737 = vxpose.xlu0.b32.cont [4/16] 0.0, 128
    %738 = vxpose.xlu0.b32.cont [5/16] 0.0, 128
    %739 = vxpose.xlu0.b32.cont [6/16] 0.0, 128
    %740 = vxpose.xlu0.b32.cont [7/16] 0.0, 128
    %741 = vxpose.xlu0.b32.cont [8/16] 0.0, 128
    %742 = vxpose.xlu0.b32.cont [9/16] 0.0, 128
    %743 = vxpose.xlu0.b32.cont [10/16] 0.0, 128
    %744 = vxpose.xlu0.b32.cont [11/16] 0.0, 128
    %745 = vxpose.xlu0.b32.cont [12/16] 0.0, 128
    %746 = vxpose.xlu0.b32.cont [13/16] 0.0, 128
    %747 = vxpose.xlu0.b32.cont [14/16] 0.0, 128
    %748 = vxpose.xlu0.b32.cont [15/16] 0.0, 128
    %749 = vxpose.xlu0.b32.end [16/16] 0.0, 128
    %v750 = vpop.trf.xlu0
    %v751 = vpop.trf.xlu0
    %v752 = vpop.trf.xlu0
    %v753 = vpop.trf.xlu0
    %v754 = vpop.trf.xlu0
    %v755 = vpop.trf.xlu0
    %v756 = vpop.trf.xlu0
    %v757 = vpop.trf.xlu0
    %v758 = vpop.trf.xlu0
    %v759 = vpop.trf.xlu0
    %v760 = vpop.trf.xlu0
    %v761 = vpop.trf.xlu0
    %v762 = vpop.trf.xlu0
    %v763 = vpop.trf.xlu0
    %v764 = vpop.trf.xlu0
    %v765 = vpop.trf.xlu0
    %vm766 = vcmask 57344
    %767 = vst.msk [vmem:[#allocation14] sm:$0x1] %vm766, %v750
    // Predicated region
    $region86: #{growth_nn_forward.1} parent=1 // pred_check
      _
    $region87: #{growth_nn_forward.1} parent=1 // pred_check_branch
      %769 = sbr.rel (0) target = $region89
    $region88: #{growth_nn_forward.1} parent=1 // pred_region
      %s771 = ssub.s32 16, 16
      %772 = vsyncadd [#allocation5], %s771
      %s774 = sshll.u32 [#allocation14], 4
      %s775 = int_to_ptr.vmem [resolvable:$true] %s774
      %777 = dma.vmem_to_hbm [thread:$0]  %s775, 16, %s15, [#allocation5]
    $region89: #{growth_nn_forward.1} parent=1 // pred_fallthru
      _
    // Predicated region
    $region90: #{growth_nn_forward.1} parent=1 // pred_check
      _
    $region91: #{growth_nn_forward.1} parent=1 // pred_check_branch
      %779 = sbr.rel (0) target = $region93
    $region92: #{growth_nn_forward.1} parent=1 // pred_region
      %780 = dma.done [#allocation5], 16
    $region93: #{growth_nn_forward.1} parent=1 // pred_fallthru
      _
    %781 = vsyncpa [#allocation4], 1
    %782 = vsyncpa [#allocation7], 1
    %783 = vsyncpa [#allocation10], 1
    %784 = vsyncpa [#allocation13], 1
    %785 = vsyncpa [#allocation5], 1

</llo_original>
